<compile_context>
chip_gen: v7x
topology: tpu7x:2x2x1
jax: 0.10.0
libtpu: 0.0.40
codegen_flags: <defaults>
</compile_context>

<pallas_src>
import math

import jax
import jax.numpy as jnp
from jax.experimental import pallas as pl
from jax.experimental.pallas import tpu as pltpu

_LANE = 128
_SUBLANE = 8


def _round_up(x, m):
    return ((x + m - 1) // m) * m


def _critic_kernel(scal_ref, x_ref, w1_ref, out_ref, mx_ref):
    # scal_ref: SMEM f32[7] = [b1, bn1_s, bn1_t, lin2bn2_s, lin2bn2_t, bn3_s, bn3_t]
    # x_ref:    VMEM [tn, D, tb]  state features (N-sliced, batch on lanes)
    # w1_ref:   VMEM [D, 1]       first Linear weight (out_features = 1)
    # out_ref:  VMEM [1, tb]      state values for this batch tile (lane-dense)
    # mx_ref:   VMEM [D, tb]      running max over the N axis (scratch accumulator)
    k = pl.program_id(1)

    @pl.when(k == 0)
    def _():
        mx_ref[...] = jnp.full_like(mx_ref, -jnp.inf)

    x = x_ref[...]
    if x.dtype != jnp.float32:          # bf16 ingest: widen right after the load
        x = x.astype(jnp.float32)
    # torch.max(state_feat, dim=1): elementwise VPU max across the tn leading slices.
    mx_ref[...] = jnp.maximum(mx_ref[...], jnp.max(x, axis=0))

    @pl.when(k == pl.num_programs(1) - 1)
    def _():
        m = mx_ref[...]                                              # [D, tb]
        w1 = w1_ref[...]                                             # [D, 1]
        # first_linear: Linear(D, 1) -> VPU multiply + one sublane reduce
        x1 = jnp.sum(m * w1, axis=0, keepdims=True) + scal_ref[0]    # [1, tb]
        h = jnp.maximum(x1 * scal_ref[1] + scal_ref[2], 0.0)         # BN1 + ReLU
        h = jnp.maximum(h * scal_ref[3] + scal_ref[4], 0.0)          # Linear(1,1)+BN2 folded, ReLU
        x2 = h + x1                                                  # residual
        out_ref[...] = (x2 * scal_ref[5] + scal_ref[6]).astype(out_ref.dtype)  # BN3


def _fold_bn(bn, eps=1e-5):
    """Eval-mode BatchNorm1d(1) params (gamma, beta, running_mean, running_var) ->
    (scale, shift).  bn=None (batch_norm=False) is the identity pair.  Trace-safe."""
    if bn is None:
        return jnp.float32(1.0), jnp.float32(0.0)
    gamma, beta, mean, var = (jnp.asarray(v, jnp.float32).reshape(()) for v in bn)
    scale = gamma * jax.lax.rsqrt(var + jnp.float32(eps))
    return scale, beta - mean * scale


def _vmem_limit_bytes():
    cap = 128 << 20
    try:
        cap = int(pltpu.get_tpu_info().vmem_capacity_bytes)
    except Exception:                    # non-TPU trace / older runtime: assume 128 MiB
        pass
    # ~64 MiB on v5e/v6e (128 MiB physical), ~48 MiB on v7x (64 MiB physical)
    return min(64 << 20, (cap * 3) // 4)


def _pick_tiles(b, n, d, itemsize, vmem_limit, batch_tile=None, n_tile=None):
    """Pick (tb, b_pad, tn, n_pad).  The batch lives on lanes, so tb must be a multiple
    of 128 unless it is a single full-extent batch tile.  tn is sized so the
    double-buffered input block stays inside the scoped-VMEM budget."""
    if batch_tile is not None:
        tb = int(batch_tile)
        if tb < b and tb % _LANE != 0:
            raise ValueError("batch_tile must be a multiple of 128 when smaller than B")
    elif b <= 2 * _LANE:
        tb = b                                   # single, full-extent batch tile
    else:
        # >=2 tiles of a 128-multiple so the "parallel" axis feeds both v7x TensorCores
        tb = min(512, max(_LANE, ((b // 2) // _LANE) * _LANE))
    b_pad = _round_up(b, tb)

    # Real per-block footprint (lanes pad to 128, sublanes to 8), x2 for the default
    # double buffering; keep a single buffer to ~1/4 of the scoped VMEM limit.
    slab = _round_up(d, _SUBLANE) * _round_up(tb, _LANE) * itemsize
    budget = max(vmem_limit // 4, 1 << 20)
    if n_tile is not None:
        tn = max(1, min(int(n_tile), n))
    else:
        tn = max(1, min(n, budget // slab))
    n_pad = _round_up(n, tn)
    return tb, b_pad, tn, n_pad


def critic_net_forward_ndb(state_feat_ndb, w1, b1, w2, b2,
                           bn1=None, bn2=None, bn3=None, *,
                           batch_tile=None, n_tile=None, vmem_limit_bytes=None):
    """CriticNet forward on the lane-dense layout.

    state_feat_ndb: [N, D, B] (batch on lanes) float32 or bfloat16
    w1:             [1, D] (or [D]) first Linear weight, b1 its scalar bias
    w2, b2:         scalars of the inner Linear(1, 1)
    bn1/bn2/bn3:    None (batch_norm=False) or (gamma, beta, running_mean, running_var)
    Returns:        [B] float32 state values.
    """
    n, d, b = state_feat_ndb.shape

    s1, t1 = _fold_bn(bn1)
    s2, t2 = _fold_bn(bn2)
    s3, t3 = _fold_bn(bn3)
    b1s = jnp.asarray(b1, jnp.float32).reshape(())
    w2s = jnp.asarray(w2, jnp.float32).reshape(())
    b2s = jnp.asarray(b2, jnp.float32).reshape(())
    # Fold Linear(1,1) into BN2:  BN2(w2*h + b2) = h*(w2*s2) + (b2*s2 + t2)
    scalars = jnp.stack([b1s, s1, t1, w2s * s2, b2s * s2 + t2, s3, t3]).astype(jnp.float32)
    w1v = jnp.asarray(w1, jnp.float32).reshape(d, 1)

    vmem_limit = int(vmem_limit_bytes) if vmem_limit_bytes is not None else _vmem_limit_bytes()
    itemsize = jnp.dtype(state_feat_ndb.dtype).itemsize
    tb, b_pad, tn, n_pad = _pick_tiles(b, n, d, itemsize, vmem_limit, batch_tile, n_tile)

    x = state_feat_ndb
    if n_pad != n:   # pad N with a large-negative fill so it never wins the running max
        fill = float(jnp.finfo(x.dtype).min)
        x = jnp.pad(x, ((0, n_pad - n), (0, 0), (0, 0)), constant_values=fill)
    if b_pad != b:   # padded batch columns are computed then sliced away
        x = jnp.pad(x, ((0, 0), (0, 0), (0, b_pad - b)))

    grid = (b_pad // tb, n_pad // tn)    # batch parallel, N reduction axis last

    out = pl.pallas_call(
        _critic_kernel,
        out_shape=jax.ShapeDtypeStruct((1, b_pad), jnp.float32),
        grid=grid,
        in_specs=[
            pl.BlockSpec(memory_space=pltpu.MemorySpace.SMEM),      # 7 packed scalar params
            pl.BlockSpec((tn, d, tb), lambda i, k: (k, 0, i)),      # features [N, D, B]
            pl.BlockSpec((d, 1), lambda i, k: (0, 0)),              # W1
        ],
        out_specs=pl.BlockSpec((1, tb), lambda i, k: (0, i)),       # lane-dense output row
        scratch_shapes=[pltpu.VMEM((d, tb), jnp.float32)],          # running max over N
        compiler_params=pltpu.CompilerParams(
            dimension_semantics=("parallel", "arbitrary"),
            vmem_limit_bytes=vmem_limit),
    )(scalars, x, w1v)
    return out[0, :b]


def critic_net_forward(state_feat, w1, b1, w2, b2, bn1=None, bn2=None, bn3=None, **kw):
    """CriticNet forward from the module-native [B, N, D] layout.

    Pure layout plumbing: transposes to [N, D, B] (batch on lanes).  Producers that can
    emit [N, D, B] directly should call critic_net_forward_ndb and skip this HBM pass.
    """
    x = jnp.transpose(jnp.asarray(state_feat), (1, 2, 0))
    return critic_net_forward_ndb(x, w1, b1, w2, b2, bn1, bn2, bn3, **kw)


def _reference(state_feat, w1, b1, w2, b2, bn1, bn2, bn3, eps=1e-5):
    def bn(x, p):
        if p is None:
            return x
        gamma, beta, mean, var = p
        return (x - mean) / jnp.sqrt(var + eps) * gamma + beta

    m = jnp.max(jnp.asarray(state_feat, jnp.float32), axis=1)              # [B, D]
    x1 = m @ jnp.asarray(w1, jnp.float32).reshape(-1, 1) + b1              # [B, 1]
    h = jax.nn.relu(bn(x1, bn1))
    h = h * w2 + b2
    h = jax.nn.relu(bn(h, bn2))
    x2 = h + x1
    return bn(x2, bn3)[:, 0]


if __name__ == "__main__":
    key = jax.random.PRNGKey(0)
    B, N, D = 16, 16, 32          # batch, set size (reduced by max over dim=1), state_feature_size
    kx, kw, kx2 = jax.random.split(key, 3)

    state_feat = jax.random.normal(kx, (B, N, D), dtype=jnp.float32)

    # first Linear(D, 1): xavier_uniform_ weight
    bound = math.sqrt(6.0 / (D + 1))
    w1 = jax.random.uniform(kw, (1, D), dtype=jnp.float32, minval=-bound, maxval=bound)
    b1 = 0.1
    # inner Linear(1, 1)
    w2, b2 = 0.7, -0.05
    # eval-mode BatchNorm1d(1) params: (gamma, beta, running_mean, running_var)
    bn1 = (1.20, 0.10, 0.05, 0.80)
    bn2 = (0.90, -0.20, -0.10, 1.10)
    bn3 = (1.05, 0.30, 0.20, 0.95)

    ref = _reference(state_feat, w1, b1, w2, b2, bn1, bn2, bn3)
    out = jax.block_until_ready(critic_net_forward(state_feat, w1, b1, w2, b2, bn1, bn2, bn3))
    assert out.shape == (B,)
    assert jnp.allclose(out, ref, rtol=1e-5, atol=1e-5), "mismatch vs reference"

    # Exercise the N-accumulator grid axis and the N-padding path as well.
    B2, N2 = 10, 13
    sf2 = jax.random.normal(kx2, (B2, N2, D), dtype=jnp.float32)
    ref2 = _reference(sf2, w1, b1, w2, b2, bn1, bn2, bn3)
    out2 = jax.block_until_ready(
        critic_net_forward(sf2, w1, b1, w2, b2, bn1, bn2, bn3, n_tile=8))
    assert out2.shape == (B2,)
    assert jnp.allclose(out2, ref2, rtol=1e-5, atol=1e-5), "mismatch vs reference (tiled/padded N)"

    print("KERNEL_OK")
</pallas_src>

<mosaic_0001>
module attributes {stable_mosaic.version = 11 : i64} {
  func.func @_critic_kernel(%arg0: i32, %arg1: i32, %arg2: memref<7xf32, #tpu.memory_space<smem>>, %arg3: memref<16x32x16xf32, #tpu.memory_space<vmem>>, %arg4: memref<32x1xf32, #tpu.memory_space<vmem>>, %arg5: memref<1x16xf32, #tpu.memory_space<vmem>>, %arg6: memref<32x16xf32, #tpu.memory_space<vmem>>) attributes {dimension_semantics = [#tpu.dimension_semantics<parallel>, #tpu.dimension_semantics<arbitrary>], iteration_bounds = array<i64: 1, 1>, scalar_prefetch = 0 : i64, scratch_operands = 1 : i64, tpu.core_type = #tpu.core_type<tc>, window_params = [{transform_indices = @transform_0, window_bounds = array<i64: 7>}, {transform_indices = @transform_1, window_bounds = array<i64: 16, 32, 16>}, {pipeline_mode = #tpu.pipeline_mode<synchronous>, transform_indices = @transform_2, window_bounds = array<i64: 32, 1>}, {transform_indices = @transform_3, window_bounds = array<i64: 1, 16>}]} {
    %c0_i32 = arith.constant 0 : i32
    %0 = arith.cmpi eq, %arg1, %c0_i32 : i32
    %1 = arith.extui %0 : i1 to i32
    %c0_i32_0 = arith.constant 0 : i32
    %2 = arith.cmpi ne, %1, %c0_i32_0 : i32
    scf.if %2 {
      %cst_9 = arith.constant 0xFF800000 : f32
      %11 = vector.broadcast %cst_9 : f32 to vector<32x16xf32>
      %c0_10 = arith.constant 0 : index
      %c0_11 = arith.constant 0 : index
      %12 = vector.load %arg6[%c0_10, %c0_11] : memref<32x16xf32, #tpu.memory_space<vmem>>, vector<32x16xf32>
      tpu.vector_store %arg6[%c0_10, %c0_11], %11 {strides = array<i32>} : memref<32x16xf32, #tpu.memory_space<vmem>>, vector<32x16xf32>,
    } else {
    }
    %c0 = arith.constant 0 : index
    %c0_1 = arith.constant 0 : index
    %c0_2 = arith.constant 0 : index
    %3 = vector.load %arg3[%c0, %c0_1, %c0_2] : memref<16x32x16xf32, #tpu.memory_space<vmem>>, vector<16x32x16xf32>
    %c0_3 = arith.constant 0 : index
    %c0_4 = arith.constant 0 : index
    %4 = vector.load %arg6[%c0_3, %c0_4] : memref<32x16xf32, #tpu.memory_space<vmem>>, vector<32x16xf32>
    %cst = arith.constant dense<0xFF800000> : vector<32x16xf32>
    %5 = vector.multi_reduction <maximumf>, %3, %cst [0] : vector<16x32x16xf32> to vector<32x16xf32>
    %6 = arith.maximumf %4, %5 : vector<32x16xf32>
    %c0_5 = arith.constant 0 : index
    %c0_6 = arith.constant 0 : index
    %7 = vector.load %arg6[%c0_5, %c0_6] : memref<32x16xf32, #tpu.memory_space<vmem>>, vector<32x16xf32>
    tpu.vector_store %arg6[%c0_5, %c0_6], %6 {strides = array<i32>} : memref<32x16xf32, #tpu.memory_space<vmem>>, vector<32x16xf32>,
    %c0_i32_7 = arith.constant 0 : i32
    %8 = arith.cmpi eq, %arg1, %c0_i32_7 : i32
    %9 = arith.extui %8 : i1 to i32
    %c0_i32_8 = arith.constant 0 : i32
    %10 = arith.cmpi ne, %9, %c0_i32_8 : i32
    scf.if %10 {
      %c0_9 = arith.constant 0 : index
      %c0_10 = arith.constant 0 : index
      %11 = vector.load %arg6[%c0_9, %c0_10] : memref<32x16xf32, #tpu.memory_space<vmem>>, vector<32x16xf32>
      %c0_11 = arith.constant 0 : index
      %c0_12 = arith.constant 0 : index
      %12 = vector.load %arg4[%c0_11, %c0_12] : memref<32x1xf32, #tpu.memory_space<vmem>>, vector<32x1xf32>
      %13 = vector.broadcast %12 : vector<32x1xf32> to vector<32x16xf32>
      %14 = arith.mulf %11, %13 : vector<32x16xf32>
      %cst_13 = arith.constant dense<0.000000e+00> : vector<16xf32>
      %15 = vector.multi_reduction <add>, %14, %cst_13 [0] : vector<32x16xf32> to vector<16xf32>
      %16 = vector.shape_cast %15 : vector<16xf32> to vector<1x16xf32>
      %c0_14 = arith.constant 0 : index
      %17 = memref.load %arg2[%c0_14] : memref<7xf32, #tpu.memory_space<smem>>
      %18 = vector.broadcast %17 : f32 to vector<1x16xf32>
      %19 = arith.addf %16, %18 : vector<1x16xf32>
      %c1 = arith.constant 1 : index
      %20 = memref.load %arg2[%c1] : memref<7xf32, #tpu.memory_space<smem>>
      %21 = vector.broadcast %20 : f32 to vector<1x16xf32>
      %22 = arith.mulf %19, %21 : vector<1x16xf32>
      %c2 = arith.constant 2 : index
      %23 = memref.load %arg2[%c2] : memref<7xf32, #tpu.memory_space<smem>>
      %24 = vector.broadcast %23 : f32 to vector<1x16xf32>
      %25 = arith.addf %22, %24 : vector<1x16xf32>
      %cst_15 = arith.constant 0.000000e+00 : f32
      %26 = vector.broadcast %cst_15 : f32 to vector<1x16xf32>
      %27 = arith.maximumf %25, %26 : vector<1x16xf32>
      %c3 = arith.constant 3 : index
      %28 = memref.load %arg2[%c3] : memref<7xf32, #tpu.memory_space<smem>>
      %29 = vector.broadcast %28 : f32 to vector<1x16xf32>
      %30 = arith.mulf %27, %29 : vector<1x16xf32>
      %c4 = arith.constant 4 : index
      %31 = memref.load %arg2[%c4] : memref<7xf32, #tpu.memory_space<smem>>
      %32 = vector.broadcast %31 : f32 to vector<1x16xf32>
      %33 = arith.addf %30, %32 : vector<1x16xf32>
      %cst_16 = arith.constant 0.000000e+00 : f32
      %34 = vector.broadcast %cst_16 : f32 to vector<1x16xf32>
      %35 = arith.maximumf %33, %34 : vector<1x16xf32>
      %36 = arith.addf %35, %19 : vector<1x16xf32>
      %c5 = arith.constant 5 : index
      %37 = memref.load %arg2[%c5] : memref<7xf32, #tpu.memory_space<smem>>
      %38 = vector.broadcast %37 : f32 to vector<1x16xf32>
      %39 = arith.mulf %36, %38 : vector<1x16xf32>
      %c6 = arith.constant 6 : index
      %40 = memref.load %arg2[%c6] : memref<7xf32, #tpu.memory_space<smem>>
      %41 = vector.broadcast %40 : f32 to vector<1x16xf32>
      %42 = arith.addf %39, %41 : vector<1x16xf32>
      %c0_17 = arith.constant 0 : index
      %c0_18 = arith.constant 0 : index
      %43 = vector.load %arg5[%c0_17, %c0_18] : memref<1x16xf32, #tpu.memory_space<vmem>>, vector<1x16xf32>
      tpu.vector_store %arg5[%c0_17, %c0_18], %42 {strides = array<i32>} : memref<1x16xf32, #tpu.memory_space<vmem>>, vector<1x16xf32>,
    } else {
    }
    return
  }
  func.func @transform_0(%arg0: i32, %arg1: i32) -> i32 {
    %c0_i32 = arith.constant 0 : i32
    %c0_i32_0 = arith.constant 0 : i32
    return %c0_i32 : i32
  }
  func.func @transform_1(%arg0: i32, %arg1: i32) -> (i32, i32, i32) {
    %c0_i32 = arith.constant 0 : i32
    %c0_i32_0 = arith.constant 0 : i32
    return %arg1, %c0_i32, %arg0 : i32, i32, i32
  }
  func.func @transform_2(%arg0: i32, %arg1: i32) -> (i32, i32) {
    %c0_i32 = arith.constant 0 : i32
    %c0_i32_0 = arith.constant 0 : i32
    %c0_i32_1 = arith.constant 0 : i32
    return %c0_i32, %c0_i32_0 : i32, i32
  }
  func.func @transform_3(%arg0: i32, %arg1: i32) -> (i32, i32) {
    %c0_i32 = arith.constant 0 : i32
    %c0_i32_0 = arith.constant 0 : i32
    return %c0_i32, %arg0 : i32, i32
  }
}

</mosaic_0001>

<llo_original>
// kernel: tpu_custom_call.1
$region0: #{tpu_custom_call.1}
  #allocation0 [shape = 'u32[]', space=smem, size = 0x4, offset = 0x4, fixed_abs, tag = 'smem constant byte address 0x4 - core index']
  #allocation1 [shape = 'u32[144,128]{1,0:T(1,128)}', space=vmem, size = 0x12000, scoped, tag = 'internal scratch']
  #allocation2 [shape = 'f32[32,16]{1,0:T(8,128)}', space=vmem, size = 0x4000, scoped, tag = 'scratch operand']
  %s0 = inlined_call_operand.hbm [shape: f32[7], index: 0, kind: input, shape index: {}]
  %s1 = inlined_call_operand.hbm [shape: f32[16,32,16], index: 1, kind: input, shape index: {}]
  %s2 = inlined_call_operand.hbm [shape: f32[32,1], index: 2, kind: input, shape index: {}]
  %s3 = inlined_call_operand.hbm [shape: f32[1,16], index: 3, kind: output, shape index: {}]
  %s4 = sld [smem:[#allocation0]]
  $region42: #{tpu_custom_call.1} parent=0
    _
  %s6 = ssub.s32 1, %s4
  %s7 = scalar_select 0, %s6, %s4
  $region1: #{tpu_custom_call.1} parent=0
    #allocation3 [shape = 'u8[512]{0}', space=smem, size = 0x200, scoped, tag = 'input window, operand 0, single buffered']
    #allocation4 [shape = 's32[1]{0}', space=sflag, size = 0x4, scoped, tag = 'scoped memory for tpu_custom_call.1']
    #allocation5 [shape = 's32[1]{0}', space=sflag, size = 0x4, scoped, tag = 'scoped memory for tpu_custom_call.1']
    #allocation6 [shape = 's32[1]{0}', space=sflag, size = 0x4, scoped, tag = 'scoped memory for tpu_custom_call.1']
    #allocation7 [shape = 'u8[262144]{0}', space=vmem, size = 0x40000, scoped, tag = 'input window, operand 1, single buffered']
    #allocation8 [shape = 'u8[16384]{0}', space=vmem, size = 0x4000, scoped, tag = 'input window, operand 2, single buffered']
    #allocation9 [shape = 's32[1]{0}', space=sflag, size = 0x4, scoped, tag = 'scoped memory for tpu_custom_call.1']
    #allocation10 [shape = 'u8[512]{0}', space=vmem, size = 0x400, scoped, tag = 'output window, operand 0, single buffered']
    %8 = vsyncpa [#allocation6], 0
    %9 = vsyncpa [#allocation4], 0
    %10 = vsyncpa [#allocation9], 0
    %11 = vsyncpa [#allocation5], 0
    // Predicated region
    $region2: #{tpu_custom_call.1} parent=1 // pred_check
      _
    $region3: #{tpu_custom_call.1} parent=1 // pred_check_branch
      %13 = sbr.rel (0) target = $region5
    $region4: #{tpu_custom_call.1} parent=1 // pred_region
      %s15 = ssub.s32 16, 16
      %16 = vsyncadd [#allocation6], %s15
      %19 = dma.hbm_to_smem %s0, 16, [#allocation3], [#allocation6]
    $region5: #{tpu_custom_call.1} parent=1 // pred_fallthru
      _
    // Predicated region
    $region6: #{tpu_custom_call.1} parent=1 // pred_check
      _
    $region7: #{tpu_custom_call.1} parent=1 // pred_check_branch
      %21 = sbr.rel (0) target = $region9
    $region8: #{tpu_custom_call.1} parent=1 // pred_region
      %s23 = ssub.s32 8192, 8192
      %24 = vsyncadd [#allocation4], %s23
      %s25 = sshll.u32 [#allocation7], 4
      %s26 = int_to_ptr.vmem [resolvable:$true] %s25
      %31 = dma.hbm_to_vmem [thread:$0]  %s1, 8192, %s26, [#allocation4], 128, 128, 8
    $region9: #{tpu_custom_call.1} parent=1 // pred_fallthru
      _
    // Predicated region
    $region10: #{tpu_custom_call.1} parent=1 // pred_check
      _
    $region11: #{tpu_custom_call.1} parent=1 // pred_check_branch
      %33 = sbr.rel (0) target = $region13
    $region12: #{tpu_custom_call.1} parent=1 // pred_region
      %s35 = ssub.s32 512, 512
      %36 = vsyncadd [#allocation9], %s35
      %s37 = sshll.u32 [#allocation8], 4
      %s38 = int_to_ptr.vmem [resolvable:$true] %s37
      %43 = dma.hbm_to_vmem [thread:$0]  %s2, 512, %s38, [#allocation9], 128, 128, 8
    $region13: #{tpu_custom_call.1} parent=1 // pred_fallthru
      _
    // Predicated region
    $region14: #{tpu_custom_call.1} parent=1 // pred_check
      _
    $region15: #{tpu_custom_call.1} parent=1 // pred_check_branch
      %45 = sbr.rel (0) target = $region17
    $region16: #{tpu_custom_call.1} parent=1 // pred_region
      %46 = dma.done [#allocation6], 16
    $region17: #{tpu_custom_call.1} parent=1 // pred_fallthru
      _
    // Predicated region
    $region18: #{tpu_custom_call.1} parent=1 // pred_check
      _
    $region19: #{tpu_custom_call.1} parent=1 // pred_check_branch
      %48 = sbr.rel (0) target = $region21
    $region20: #{tpu_custom_call.1} parent=1 // pred_region
      %49 = dma.done [#allocation4], 8192
    $region21: #{tpu_custom_call.1} parent=1 // pred_fallthru
      _
    // Predicated region
    $region22: #{tpu_custom_call.1} parent=1 // pred_check
      _
    $region23: #{tpu_custom_call.1} parent=1 // pred_check_branch
      %51 = sbr.rel (0) target = $region25
    $region24: #{tpu_custom_call.1} parent=1 // pred_region
      %52 = dma.done [#allocation9], 512
    $region25: #{tpu_custom_call.1} parent=1 // pred_fallthru
      _
    %53 = sfence
    %p54 = scmp.eq.s32.totalorder 0, 0
    // Predicated region
    $region26: #{tpu_custom_call.1} parent=1 // pred_check
      %p55 = pneg %p54
    $region27: #{tpu_custom_call.1} parent=1 // pred_check_branch
      %57 = sbr.rel (%p55) target = $region29
    $region28: #{tpu_custom_call.1} parent=1 // pred_region
      %vm58 = vcmask 130048
      %59 = vst.msk [vmem:[#allocation2] sm:$0xff] %vm58, -inf
      %60 = vst.msk [vmem:[#allocation2 + $0x8] sm:$0xff] %vm58, -inf
      %61 = vst.msk [vmem:[#allocation2 + $0x10] sm:$0xff] %vm58, -inf
      %62 = vst.msk [vmem:[#allocation2 + $0x18] sm:$0xff] %vm58, -inf
    $region29: #{tpu_custom_call.1} parent=1 // pred_fallthru
      _
    %v63 = vld [vmem:[#allocation7] sm:$0xff]
    %v64 = vld [vmem:[#allocation7 + $0x8] sm:$0xff]
    %v65 = vld [vmem:[#allocation7 + $0x10] sm:$0xff]
    %v66 = vld [vmem:[#allocation7 + $0x18] sm:$0xff]
    %v67 = vld [vmem:[#allocation7 + $0x20] sm:$0xff]
    %v68 = vld [vmem:[#allocation7 + $0x28] sm:$0xff]
    %v69 = vld [vmem:[#allocation7 + $0x30] sm:$0xff]
    %v70 = vld [vmem:[#allocation7 + $0x38] sm:$0xff]
    %v71 = vld [vmem:[#allocation7 + $0x40] sm:$0xff]
    %v72 = vld [vmem:[#allocation7 + $0x48] sm:$0xff]
    %v73 = vld [vmem:[#allocation7 + $0x50] sm:$0xff]
    %v74 = vld [vmem:[#allocation7 + $0x58] sm:$0xff]
    %v75 = vld [vmem:[#allocation7 + $0x60] sm:$0xff]
    %v76 = vld [vmem:[#allocation7 + $0x68] sm:$0xff]
    %v77 = vld [vmem:[#allocation7 + $0x70] sm:$0xff]
    %v78 = vld [vmem:[#allocation7 + $0x78] sm:$0xff]
    %v79 = vld [vmem:[#allocation7 + $0x80] sm:$0xff]
    %v80 = vld [vmem:[#allocation7 + $0x88] sm:$0xff]
    %v81 = vld [vmem:[#allocation7 + $0x90] sm:$0xff]
    %v82 = vld [vmem:[#allocation7 + $0x98] sm:$0xff]
    %v83 = vld [vmem:[#allocation7 + $0xa0] sm:$0xff]
    %v84 = vld [vmem:[#allocation7 + $0xa8] sm:$0xff]
    %v85 = vld [vmem:[#allocation7 + $0xb0] sm:$0xff]
    %v86 = vld [vmem:[#allocation7 + $0xb8] sm:$0xff]
    %v87 = vld [vmem:[#allocation7 + $0xc0] sm:$0xff]
    %v88 = vld [vmem:[#allocation7 + $0xc8] sm:$0xff]
    %v89 = vld [vmem:[#allocation7 + $0xd0] sm:$0xff]
    %v90 = vld [vmem:[#allocation7 + $0xd8] sm:$0xff]
    %v91 = vld [vmem:[#allocation7 + $0xe0] sm:$0xff]
    %v92 = vld [vmem:[#allocation7 + $0xe8] sm:$0xff]
    %v93 = vld [vmem:[#allocation7 + $0xf0] sm:$0xff]
    %v94 = vld [vmem:[#allocation7 + $0xf8] sm:$0xff]
    %v95 = vld [vmem:[#allocation7 + $0x100] sm:$0xff]
    %v96 = vld [vmem:[#allocation7 + $0x108] sm:$0xff]
    %v97 = vld [vmem:[#allocation7 + $0x110] sm:$0xff]
    %v98 = vld [vmem:[#allocation7 + $0x118] sm:$0xff]
    %v99 = vld [vmem:[#allocation7 + $0x120] sm:$0xff]
    %v100 = vld [vmem:[#allocation7 + $0x128] sm:$0xff]
    %v101 = vld [vmem:[#allocation7 + $0x130] sm:$0xff]
    %v102 = vld [vmem:[#allocation7 + $0x138] sm:$0xff]
    %v103 = vld [vmem:[#allocation7 + $0x140] sm:$0xff]
    %v104 = vld [vmem:[#allocation7 + $0x148] sm:$0xff]
    %v105 = vld [vmem:[#allocation7 + $0x150] sm:$0xff]
    %v106 = vld [vmem:[#allocation7 + $0x158] sm:$0xff]
    %v107 = vld [vmem:[#allocation7 + $0x160] sm:$0xff]
    %v108 = vld [vmem:[#allocation7 + $0x168] sm:$0xff]
    %v109 = vld [vmem:[#allocation7 + $0x170] sm:$0xff]
    %v110 = vld [vmem:[#allocation7 + $0x178] sm:$0xff]
    %v111 = vld [vmem:[#allocation7 + $0x180] sm:$0xff]
    %v112 = vld [vmem:[#allocation7 + $0x188] sm:$0xff]
    %v113 = vld [vmem:[#allocation7 + $0x190] sm:$0xff]
    %v114 = vld [vmem:[#allocation7 + $0x198] sm:$0xff]
    %v115 = vld [vmem:[#allocation7 + $0x1a0] sm:$0xff]
    %v116 = vld [vmem:[#allocation7 + $0x1a8] sm:$0xff]
    %v117 = vld [vmem:[#allocation7 + $0x1b0] sm:$0xff]
    %v118 = vld [vmem:[#allocation7 + $0x1b8] sm:$0xff]
    %v119 = vld [vmem:[#allocation7 + $0x1c0] sm:$0xff]
    %v120 = vld [vmem:[#allocation7 + $0x1c8] sm:$0xff]
    %v121 = vld [vmem:[#allocation7 + $0x1d0] sm:$0xff]
    %v122 = vld [vmem:[#allocation7 + $0x1d8] sm:$0xff]
    %v123 = vld [vmem:[#allocation7 + $0x1e0] sm:$0xff]
    %v124 = vld [vmem:[#allocation7 + $0x1e8] sm:$0xff]
    %v125 = vld [vmem:[#allocation7 + $0x1f0] sm:$0xff]
    %v126 = vld [vmem:[#allocation7 + $0x1f8] sm:$0xff]
    %v127 = vld [vmem:[#allocation2] sm:$0xff]
    %v128 = vld [vmem:[#allocation2 + $0x8] sm:$0xff]
    %v129 = vld [vmem:[#allocation2 + $0x10] sm:$0xff]
    %v130 = vld [vmem:[#allocation2 + $0x18] sm:$0xff]
    %vm131 = vcmask 130048
    %v132 = vsel %vm131, %v63, -inf
    %v133 = vsel %vm131, %v67, -inf
    %v134 = vmax.f32 %v132, %v133
    %v135 = vsel %vm131, %v71, -inf
    %v136 = vmax.f32 %v134, %v135
    %v137 = vsel %vm131, %v75, -inf
    %v138 = vmax.f32 %v136, %v137
    %v139 = vsel %vm131, %v79, -inf
    %v140 = vmax.f32 %v138, %v139
    %v141 = vsel %vm131, %v83, -inf
    %v142 = vmax.f32 %v140, %v141
    %v143 = vsel %vm131, %v87, -inf
    %v144 = vmax.f32 %v142, %v143
    %v145 = vsel %vm131, %v91, -inf
    %v146 = vmax.f32 %v144, %v145
    %v147 = vsel %vm131, %v95, -inf
    %v148 = vmax.f32 %v146, %v147
    %v149 = vsel %vm131, %v99, -inf
    %v150 = vmax.f32 %v148, %v149
    %v151 = vsel %vm131, %v103, -inf
    %v152 = vmax.f32 %v150, %v151
    %v153 = vsel %vm131, %v107, -inf
    %v154 = vmax.f32 %v152, %v153
    %v155 = vsel %vm131, %v111, -inf
    %v156 = vmax.f32 %v154, %v155
    %v157 = vsel %vm131, %v115, -inf
    %v158 = vmax.f32 %v156, %v157
    %v159 = vsel %vm131, %v119, -inf
    %v160 = vmax.f32 %v158, %v159
    %v161 = vsel %vm131, %v123, -inf
    %v162 = vmax.f32 %v160, %v161
    %v163 = vsel %vm131, %v64, -inf
    %v164 = vsel %vm131, %v68, -inf
    %v165 = vmax.f32 %v163, %v164
    %v166 = vsel %vm131, %v72, -inf
    %v167 = vmax.f32 %v165, %v166
    %v168 = vsel %vm131, %v76, -inf
    %v169 = vmax.f32 %v167, %v168
    %v170 = vsel %vm131, %v80, -inf
    %v171 = vmax.f32 %v169, %v170
    %v172 = vsel %vm131, %v84, -inf
    %v173 = vmax.f32 %v171, %v172
    %v174 = vsel %vm131, %v88, -inf
    %v175 = vmax.f32 %v173, %v174
    %v176 = vsel %vm131, %v92, -inf
    %v177 = vmax.f32 %v175, %v176
    %v178 = vsel %vm131, %v96, -inf
    %v179 = vmax.f32 %v177, %v178
    %v180 = vsel %vm131, %v100, -inf
    %v181 = vmax.f32 %v179, %v180
    %v182 = vsel %vm131, %v104, -inf
    %v183 = vmax.f32 %v181, %v182
    %v184 = vsel %vm131, %v108, -inf
    %v185 = vmax.f32 %v183, %v184
    %v186 = vsel %vm131, %v112, -inf
    %v187 = vmax.f32 %v185, %v186
    %v188 = vsel %vm131, %v116, -inf
    %v189 = vmax.f32 %v187, %v188
    %v190 = vsel %vm131, %v120, -inf
    %v191 = vmax.f32 %v189, %v190
    %v192 = vsel %vm131, %v124, -inf
    %v193 = vmax.f32 %v191, %v192
    %v194 = vsel %vm131, %v65, -inf
    %v195 = vsel %vm131, %v69, -inf
    %v196 = vmax.f32 %v194, %v195
    %v197 = vsel %vm131, %v73, -inf
    %v198 = vmax.f32 %v196, %v197
    %v199 = vsel %vm131, %v77, -inf
    %v200 = vmax.f32 %v198, %v199
    %v201 = vsel %vm131, %v81, -inf
    %v202 = vmax.f32 %v200, %v201
    %v203 = vsel %vm131, %v85, -inf
    %v204 = vmax.f32 %v202, %v203
    %v205 = vsel %vm131, %v89, -inf
    %v206 = vmax.f32 %v204, %v205
    %v207 = vsel %vm131, %v93, -inf
    %v208 = vmax.f32 %v206, %v207
    %v209 = vsel %vm131, %v97, -inf
    %v210 = vmax.f32 %v208, %v209
    %v211 = vsel %vm131, %v101, -inf
    %v212 = vmax.f32 %v210, %v211
    %v213 = vsel %vm131, %v105, -inf
    %v214 = vmax.f32 %v212, %v213
    %v215 = vsel %vm131, %v109, -inf
    %v216 = vmax.f32 %v214, %v215
    %v217 = vsel %vm131, %v113, -inf
    %v218 = vmax.f32 %v216, %v217
    %v219 = vsel %vm131, %v117, -inf
    %v220 = vmax.f32 %v218, %v219
    %v221 = vsel %vm131, %v121, -inf
    %v222 = vmax.f32 %v220, %v221
    %v223 = vsel %vm131, %v125, -inf
    %v224 = vmax.f32 %v222, %v223
    %v225 = vsel %vm131, %v66, -inf
    %v226 = vsel %vm131, %v70, -inf
    %v227 = vmax.f32 %v225, %v226
    %v228 = vsel %vm131, %v74, -inf
    %v229 = vmax.f32 %v227, %v228
    %v230 = vsel %vm131, %v78, -inf
    %v231 = vmax.f32 %v229, %v230
    %v232 = vsel %vm131, %v82, -inf
    %v233 = vmax.f32 %v231, %v232
    %v234 = vsel %vm131, %v86, -inf
    %v235 = vmax.f32 %v233, %v234
    %v236 = vsel %vm131, %v90, -inf
    %v237 = vmax.f32 %v235, %v236
    %v238 = vsel %vm131, %v94, -inf
    %v239 = vmax.f32 %v237, %v238
    %v240 = vsel %vm131, %v98, -inf
    %v241 = vmax.f32 %v239, %v240
    %v242 = vsel %vm131, %v102, -inf
    %v243 = vmax.f32 %v241, %v242
    %v244 = vsel %vm131, %v106, -inf
    %v245 = vmax.f32 %v243, %v244
    %v246 = vsel %vm131, %v110, -inf
    %v247 = vmax.f32 %v245, %v246
    %v248 = vsel %vm131, %v114, -inf
    %v249 = vmax.f32 %v247, %v248
    %v250 = vsel %vm131, %v118, -inf
    %v251 = vmax.f32 %v249, %v250
    %v252 = vsel %vm131, %v122, -inf
    %v253 = vmax.f32 %v251, %v252
    %v254 = vsel %vm131, %v126, -inf
    %v255 = vmax.f32 %v253, %v254
    %v256 = vmax.f32 %v127, %v162
    %v257 = vmax.f32 %v128, %v193
    %v258 = vmax.f32 %v129, %v224
    %v259 = vmax.f32 %v130, %v255
    %260 = vst.msk [vmem:[#allocation2] sm:$0xff] %vm131, %v256
    %261 = vst.msk [vmem:[#allocation2 + $0x8] sm:$0xff] %vm131, %v257
    %262 = vst.msk [vmem:[#allocation2 + $0x10] sm:$0xff] %vm131, %v258
    %263 = vst.msk [vmem:[#allocation2 + $0x18] sm:$0xff] %vm131, %v259
    // Predicated region
    $region30: #{tpu_custom_call.1} parent=1 // pred_check
      %p264 = pneg %p54
    $region31: #{tpu_custom_call.1} parent=1 // pred_check_branch
      %266 = sbr.rel (%p264) target = $region33
    $region32: #{tpu_custom_call.1} parent=1 // pred_region
      %v267 = vld [vmem:[#allocation2] sm:$0xff]
      %v268 = vld [vmem:[#allocation2 + $0x8] sm:$0xff]
      %v269 = vld [vmem:[#allocation2 + $0x10] sm:$0xff]
      %v270 = vld [vmem:[#allocation2 + $0x18] sm:$0xff]
      %v271 = vld [vmem:[#allocation8] sm:$0xff]
      %v272 = vld [vmem:[#allocation8 + $0x8] sm:$0xff]
      %v273 = vld [vmem:[#allocation8 + $0x10] sm:$0xff]
      %v274 = vld [vmem:[#allocation8 + $0x18] sm:$0xff]
      %276 = vset.pattern.permute.xlu0 0
      %277 = vperm.xlu0 %276, %v271
      %v278 = vpop.permute.xlu0 %277
      %281 = vset.pattern.permute.xlu0 0
      %282 = vperm.xlu0 %281, %v272
      %v283 = vpop.permute.xlu0 %282
      %286 = vset.pattern.permute.xlu0 0
      %287 = vperm.xlu0 %286, %v273
      %v288 = vpop.permute.xlu0 %287
      %291 = vset.pattern.permute.xlu0 0
      %292 = vperm.xlu0 %291, %v274
      %v293 = vpop.permute.xlu0 %292
      %v295 = vmul.f32 %v267, %v278
      %v296 = vmul.f32 %v268, %v283
      %v297 = vmul.f32 %v269, %v288
      %v298 = vmul.f32 %v270, %v293
      %v299 = vsel %vm131, %v295, 0.0
      %v300 = vsel %vm131, %v296, 0.0
      %v301 = vadd.f32 %v299, %v300
      %v302 = vsel %vm131, %v297, 0.0
      %v303 = vadd.f32 %v301, %v302
      %v304 = vsel %vm131, %v298, 0.0
      %v305 = vadd.f32 %v303, %v304
      %v306 = vrot.slane %v305, 4
      %v307 = vadd.f32 %v305, %v306
      %v308 = vrot.slane %v307, 2
      %v309 = vadd.f32 %v307, %v308
      %v310 = vrot.slane %v309, 1
      %v311 = vadd.f32 %v309, %v310
      %s312 = sld [smem:[#allocation3]]
      %v313 = vstv %s312
      %v314 = vadd.f32 %v311, %v313
      %s315 = sld [smem:[#allocation3 + $0x1]]
      %v316 = vstv %s315
      %v317 = vmul.f32 %v314, %v316
      %s318 = sld [smem:[#allocation3 + $0x2]]
      %v319 = vstv %s318
      %v320 = vadd.f32 %v317, %v319
      %v321 = vmax.f32 %v320, 0.0
      %s322 = sld [smem:[#allocation3 + $0x3]]
      %v323 = vstv %s322
      %v324 = vmul.f32 %v321, %v323
      %s325 = sld [smem:[#allocation3 + $0x4]]
      %v326 = vstv %s325
      %v327 = vadd.f32 %v324, %v326
      %v328 = vmax.f32 %v327, 0.0
      %v329 = vadd.f32 %v328, %v314
      %s330 = sld [smem:[#allocation3 + $0x5]]
      %v331 = vstv %s330
      %v332 = vmul.f32 %v329, %v331
      %s333 = sld [smem:[#allocation3 + $0x6]]
      %v334 = vstv %s333
      %v335 = vadd.f32 %v332, %v334
      %vm336 = vcmask 122880
      %337 = vst.msk [vmem:[#allocation10] sm:$0x1] %vm336, %v335
    $region33: #{tpu_custom_call.1} parent=1 // pred_fallthru
      _
    // Predicated region
    $region34: #{tpu_custom_call.1} parent=1 // pred_check
      _
    $region35: #{tpu_custom_call.1} parent=1 // pred_check_branch
      %339 = sbr.rel (0) target = $region37
    $region36: #{tpu_custom_call.1} parent=1 // pred_region
      %s341 = ssub.s32 16, 16
      %342 = vsyncadd [#allocation5], %s341
      %s344 = sshll.u32 [#allocation10], 4
      %s345 = int_to_ptr.vmem [resolvable:$true] %s344
      %347 = dma.vmem_to_hbm [thread:$0]  %s345, 16, %s3, [#allocation5]
    $region37: #{tpu_custom_call.1} parent=1 // pred_fallthru
      _
    // Predicated region
    $region38: #{tpu_custom_call.1} parent=1 // pred_check
      _
    $region39: #{tpu_custom_call.1} parent=1 // pred_check_branch
      %349 = sbr.rel (0) target = $region41
    $region40: #{tpu_custom_call.1} parent=1 // pred_region
      %350 = dma.done [#allocation5], 16
    $region41: #{tpu_custom_call.1} parent=1 // pred_fallthru
      _
    %351 = vsyncpa [#allocation4], 1
    %352 = vsyncpa [#allocation9], 1
    %353 = vsyncpa [#allocation5], 1
    %354 = vsyncpa [#allocation6], 1

</llo_original>
